<compile_context>
chip_gen: v5e
topology: v5e:2x2
jax: 0.10.0
libtpu: 0.0.40
codegen_flags: <defaults>
</compile_context>

<pallas_src>
import functools

import jax
import jax.numpy as jnp
from jax.experimental import pallas as pl
from jax.experimental.pallas import tpu as pltpu


N_CLASS = 10
N_PAD = 128          # lane-dense padded class dimension
MAX_TK = 4096        # K tile cap (v7x-safe VMEM footprint with double buffering)


def _round_up(x, m):
    return (x + m - 1) // m * m


def _linear_kernel(x_ref, w_ref, b_ref, o_ref, acc_ref):
    """acc += x_tile @ w_tile ; on last K step store acc + bias.

    Grid = (batch_tiles, k_tiles). The output block is resident across the
    K axis and accumulated in f32 scratch.
    """
    k = pl.program_id(1)

    @pl.when(k == 0)
    def _():
        acc_ref[...] = jnp.zeros_like(acc_ref)

    acc_ref[...] += jnp.dot(
        x_ref[...], w_ref[...], preferred_element_type=jnp.float32
    )

    @pl.when(k == pl.num_programs(1) - 1)
    def _():
        o_ref[...] = (acc_ref[...] + b_ref[...]).astype(o_ref.dtype)


@functools.partial(jax.jit, static_argnames=("n_class",))
def _padded_linear(x_pad, w_pad, b_pad, *, n_class):
    """x_pad: (n_pad, d_pad), w_pad: (d_pad, N_PAD), b_pad: (1, N_PAD)."""
    n_pad, d_pad = x_pad.shape

    tm = n_pad if n_pad <= 128 else 128
    tk = d_pad if d_pad <= MAX_TK else MAX_TK
    grid = (n_pad // tm, d_pad // tk)

    out = pl.pallas_call(
        _linear_kernel,
        out_shape=jax.ShapeDtypeStruct((n_pad, N_PAD), jnp.float32),
        grid_spec=pltpu.PrefetchScalarGridSpec(
            num_scalar_prefetch=0,
            grid=grid,
            in_specs=[
                pl.BlockSpec((tm, tk), lambda i, k: (i, k)),      # x tile
                pl.BlockSpec((tk, N_PAD), lambda i, k: (k, 0)),   # folded W tile (lane-dense)
                pl.BlockSpec((1, N_PAD), lambda i, k: (0, 0)),    # folded bias (resident)
            ],
            out_specs=pl.BlockSpec((tm, N_PAD), lambda i, k: (i, 0)),
            scratch_shapes=[pltpu.VMEM((tm, N_PAD), jnp.float32)],
        ),
        compiler_params=pltpu.CompilerParams(
            dimension_semantics=("parallel", "arbitrary"),
        ),
    )(x_pad, w_pad, b_pad)
    return out


def general_torch_model_forward(image, w, b, im_mean=None, im_std=None):
    """JAX/Pallas equivalent of GeneralTorchModel.forward.

    image: (N, C, H, W) or (C, H, W) float32
    w:     (C*H*W, n_class) float32 weights of the synthetic inner model
    b:     (n_class,)       float32 bias
    im_mean / im_std: optional length-C sequences (per-channel normalization);
    normalization is applied only when BOTH are given (matches the PyTorch module).
    """
    image = jnp.asarray(image, jnp.float32)
    if image.ndim == 3:                      # unsqueeze(0)
        image = image[None, ...]
    n, c, h, wd = image.shape
    d = c * h * wd
    n_class = w.shape[1]
    assert n_class <= N_PAD, "n_class must fit in one 128-lane tile"

    w = jnp.asarray(w, jnp.float32)
    b = jnp.asarray(b, jnp.float32)

    # --- fold per-channel normalization into W / b (glue, one-time cost) ---
    if im_mean is not None and im_std is not None:
        stdinv_flat = jnp.repeat(1.0 / jnp.asarray(im_std, jnp.float32), h * wd)
        mean_flat = jnp.repeat(jnp.asarray(im_mean, jnp.float32), h * wd)
        w_fold = w * stdinv_flat[:, None]          # (D, n_class)
        b_fold = b - mean_flat @ w_fold            # (n_class,)
    else:
        w_fold = w
        b_fold = b

    # --- pad to TPU-friendly shapes (zero padding is exact for the GEMM) ---
    d_pad = _round_up(d, 128)
    if d_pad > MAX_TK:
        d_pad = _round_up(d_pad, MAX_TK)
    n_pad = _round_up(n, 8) if n <= 128 else _round_up(n, 128)

    x_flat = image.reshape(n, d)
    x_pad = jnp.pad(x_flat, ((0, n_pad - n), (0, d_pad - d)))
    w_pad = jnp.pad(w_fold, ((0, d_pad - d), (0, N_PAD - n_class)))
    b_pad = jnp.pad(b_fold, (0, N_PAD - n_class)).reshape(1, N_PAD)

    out = _padded_linear(x_pad, w_pad, b_pad, n_class=n_class)
    return out[:n, :n_class]


def predict_label(image, w, b, im_mean=None, im_std=None):
    """Equivalent of GeneralTorchModel.predict_label (clamp -> logits -> argmax)."""
    image = jnp.clip(jnp.asarray(image, jnp.float32), 0.0, 1.0)
    logits = general_torch_model_forward(image, w, b, im_mean, im_std)
    return jnp.argmax(logits, axis=1)


if __name__ == "__main__":
    # Small shapes consistent with the module's NCHW image input.
    N, C, H, W = 2, 4, 16, 16
    D = C * H * W

    key = jax.random.PRNGKey(0)
    k_img, k_w, k_b = jax.random.split(key, 3)

    image = jax.random.uniform(k_img, (N, C, H, W), jnp.float32)          # in [0, 1]
    w = jax.random.normal(k_w, (D, N_CLASS), jnp.float32) * 0.02          # synthetic inner model
    b = jax.random.normal(k_b, (N_CLASS,), jnp.float32) * 0.1

    im_mean = [0.485, 0.456, 0.406, 0.5]   # per-channel (C = 4)
    im_std = [0.229, 0.224, 0.225, 0.25]

    logits = general_torch_model_forward(image, w, b, im_mean, im_std)
    logits = jax.block_until_ready(logits)
    assert logits.shape == (N, N_CLASS)

    # Pure-JAX reference check (same math, no Pallas, no folding).
    mean_a = jnp.asarray(im_mean, jnp.float32).reshape(1, C, 1, 1)
    std_a = jnp.asarray(im_std, jnp.float32).reshape(1, C, 1, 1)
    ref = ((image - mean_a) / std_a).reshape(N, D) @ w + b
    assert jnp.allclose(logits, ref, atol=2e-4, rtol=2e-4), "mismatch vs reference"

    # No-normalization path (im_mean/im_std not both given -> identity preprocess).
    logits_plain = jax.block_until_ready(general_torch_model_forward(image, w, b))
    ref_plain = image.reshape(N, D) @ w + b
    assert jnp.allclose(logits_plain, ref_plain, atol=2e-4, rtol=2e-4)

    labels = jax.block_until_ready(predict_label(image, w, b, im_mean, im_std))
    assert labels.shape == (N,)

    print("KERNEL_OK")
</pallas_src>

<mosaic_0001>
module attributes {stable_mosaic.version = 11 : i64} {
  func.func @_linear_kernel(%arg0: i32, %arg1: i32, %arg2: memref<8x1024xf32, #tpu.memory_space<vmem>>, %arg3: memref<1024x128xf32, #tpu.memory_space<vmem>>, %arg4: memref<1x128xf32, #tpu.memory_space<vmem>>, %arg5: memref<8x128xf32, #tpu.memory_space<vmem>>, %arg6: memref<8x128xf32, #tpu.memory_space<vmem>>) attributes {dimension_semantics = [#tpu.dimension_semantics<parallel>, #tpu.dimension_semantics<arbitrary>], iteration_bounds = array<i64: 1, 1>, scalar_prefetch = 0 : i64, scratch_operands = 1 : i64, tpu.core_type = #tpu.core_type<tc>, window_params = [{transform_indices = @transform_0, window_bounds = array<i64: 8, 1024>}, {transform_indices = @transform_1, window_bounds = array<i64: 1024, 128>}, {pipeline_mode = #tpu.pipeline_mode<synchronous>, transform_indices = @transform_2, window_bounds = array<i64: 1, 128>}, {transform_indices = @transform_3, window_bounds = array<i64: 8, 128>}]} {
    %c0_i32 = arith.constant 0 : i32
    %0 = arith.cmpi eq, %arg1, %c0_i32 : i32
    %1 = arith.extui %0 : i1 to i32
    %c0_i32_0 = arith.constant 0 : i32
    %2 = arith.cmpi ne, %1, %c0_i32_0 : i32
    scf.if %2 {
      %cst_10 = arith.constant 0.000000e+00 : f32
      %12 = vector.broadcast %cst_10 : f32 to vector<8x128xf32>
      %c0_11 = arith.constant 0 : index
      %c0_12 = arith.constant 0 : index
      %13 = vector.load %arg6[%c0_11, %c0_12] : memref<8x128xf32, #tpu.memory_space<vmem>>, vector<8x128xf32>
      tpu.vector_store %arg6[%c0_11, %c0_12], %12 {strides = array<i32>} : memref<8x128xf32, #tpu.memory_space<vmem>>, vector<8x128xf32>,
    } else {
    }
    %c0 = arith.constant 0 : index
    %c0_1 = arith.constant 0 : index
    %3 = vector.load %arg6[%c0, %c0_1] : memref<8x128xf32, #tpu.memory_space<vmem>>, vector<8x128xf32>
    %c0_2 = arith.constant 0 : index
    %c0_3 = arith.constant 0 : index
    %4 = vector.load %arg2[%c0_2, %c0_3] : memref<8x1024xf32, #tpu.memory_space<vmem>>, vector<8x1024xf32>
    %c0_4 = arith.constant 0 : index
    %c0_5 = arith.constant 0 : index
    %5 = vector.load %arg3[%c0_4, %c0_5] : memref<1024x128xf32, #tpu.memory_space<vmem>>, vector<1024x128xf32>
    %cst = arith.constant dense<0.000000e+00> : vector<8x128xf32>
    %6 = tpu.matmul %4, %5, %cst {dimension_numbers = #tpu.dot_dimension_numbers<[1], [0], [0], [1], [0, 0, 1, 1], [], []>} : vector<8x1024xf32>, vector<1024x128xf32>, vector<8x128xf32> -> vector<8x128xf32>
    %7 = arith.addf %3, %6 : vector<8x128xf32>
    %c0_6 = arith.constant 0 : index
    %c0_7 = arith.constant 0 : index
    %8 = vector.load %arg6[%c0_6, %c0_7] : memref<8x128xf32, #tpu.memory_space<vmem>>, vector<8x128xf32>
    tpu.vector_store %arg6[%c0_6, %c0_7], %7 {strides = array<i32>} : memref<8x128xf32, #tpu.memory_space<vmem>>, vector<8x128xf32>,
    %c0_i32_8 = arith.constant 0 : i32
    %9 = arith.cmpi eq, %arg1, %c0_i32_8 : i32
    %10 = arith.extui %9 : i1 to i32
    %c0_i32_9 = arith.constant 0 : i32
    %11 = arith.cmpi ne, %10, %c0_i32_9 : i32
    scf.if %11 {
      %c0_10 = arith.constant 0 : index
      %c0_11 = arith.constant 0 : index
      %12 = vector.load %arg6[%c0_10, %c0_11] : memref<8x128xf32, #tpu.memory_space<vmem>>, vector<8x128xf32>
      %c0_12 = arith.constant 0 : index
      %c0_13 = arith.constant 0 : index
      %13 = vector.load %arg4[%c0_12, %c0_13] : memref<1x128xf32, #tpu.memory_space<vmem>>, vector<1x128xf32>
      %14 = vector.broadcast %13 : vector<1x128xf32> to vector<8x128xf32>
      %15 = arith.addf %12, %14 : vector<8x128xf32>
      %c0_14 = arith.constant 0 : index
      %c0_15 = arith.constant 0 : index
      %16 = vector.load %arg5[%c0_14, %c0_15] : memref<8x128xf32, #tpu.memory_space<vmem>>, vector<8x128xf32>
      tpu.vector_store %arg5[%c0_14, %c0_15], %15 {strides = array<i32>} : memref<8x128xf32, #tpu.memory_space<vmem>>, vector<8x128xf32>,
    } else {
    }
    return
  }
  func.func @transform_0(%arg0: i32, %arg1: i32) -> (i32, i32) {
    %c0_i32 = arith.constant 0 : i32
    return %arg0, %arg1 : i32, i32
  }
  func.func @transform_1(%arg0: i32, %arg1: i32) -> (i32, i32) {
    %c0_i32 = arith.constant 0 : i32
    %c0_i32_0 = arith.constant 0 : i32
    return %arg1, %c0_i32 : i32, i32
  }
  func.func @transform_2(%arg0: i32, %arg1: i32) -> (i32, i32) {
    %c0_i32 = arith.constant 0 : i32
    %c0_i32_0 = arith.constant 0 : i32
    %c0_i32_1 = arith.constant 0 : i32
    return %c0_i32, %c0_i32_0 : i32, i32
  }
  func.func @transform_3(%arg0: i32, %arg1: i32) -> (i32, i32) {
    %c0_i32 = arith.constant 0 : i32
    %c0_i32_0 = arith.constant 0 : i32
    return %arg0, %c0_i32 : i32, i32
  }
}

</mosaic_0001>

<llo_original>
// kernel: _padded_linear.1
$region0: #{_padded_linear.1}
  #allocation0 [shape = 'u32[]', space=smem, size = 0x4, offset = 0x4, fixed_abs, tag = 'smem constant byte address 0x4 - core index']
  #allocation1 [shape = 'u32[72,128]{1,0:T(1,128)}', space=vmem, size = 0x9000, scoped, tag = 'internal scratch']
  #allocation2 [shape = 'f32[8,128]{1,0:T(8,128)}', space=vmem, size = 0x1000, scoped, tag = 'scratch operand']
  %s0 = inlined_call_operand.hbm [shape: f32[8,1024], index: 0, kind: input, shape index: {}]
  %s1 = inlined_call_operand.hbm [shape: f32[1024,128], index: 1, kind: input, shape index: {}]
  %s2 = inlined_call_operand.vmem [shape: f32[1,128], index: 2, kind: input, shape index: {}]
  %s3 = inlined_call_operand.hbm [shape: f32[8,128], index: 3, kind: output, shape index: {}]
  %s4 = sld [smem:[#allocation0]]
  $region38: #{_padded_linear.1} parent=0
    _
  %s6 = ssub.s32 1, %s4
  %s7 = scalar_select 0, %s6, %s4
  $region1: #{_padded_linear.1} parent=0
    #allocation3 [shape = 'u8[32768]{0}', space=vmem, size = 0x8000, scoped, tag = 'input window, operand 0, single buffered']
    #allocation4 [shape = 's32[1]{0}', space=sflag, size = 0x4, scoped, tag = 'scoped memory for _padded_linear.1']
    #allocation5 [shape = 's32[1]{0}', space=sflag, size = 0x4, scoped, tag = 'scoped memory for _padded_linear.1']
    #allocation6 [shape = 'u8[524288]{0}', space=vmem, size = 0x80000, scoped, tag = 'input window, operand 1, single buffered']
    #allocation7 [shape = 's32[1]{0}', space=sflag, size = 0x4, scoped, tag = 'scoped memory for _padded_linear.1']
    #allocation8 [shape = 'u8[4096]{0}', space=vmem, size = 0x1000, scoped, tag = 'output window, operand 0, single buffered']
    %8 = vsyncpa [#allocation4], 0
    %9 = vsyncpa [#allocation7], 0
    %10 = vsyncpa [#allocation5], 0
    // Predicated region
    $region2: #{_padded_linear.1} parent=1 // pred_check
      _
    $region3: #{_padded_linear.1} parent=1 // pred_check_branch
      %12 = sbr.rel (0) target = $region5
    $region4: #{_padded_linear.1} parent=1 // pred_region
      %14 = vsyncadd [#allocation4], 0
      %s16 = sshll.u32 %s0, 4
      %s17 = int_to_ptr.hbm [resolvable:$true] %s16
      %s18 = sshll.u32 [#allocation3], 4
      %s19 = int_to_ptr.vmem [resolvable:$true] %s18
      %21 = dma.hbm_to_vmem [thread:$0]  %s17, 1024, %s19, [#allocation4]
    $region5: #{_padded_linear.1} parent=1 // pred_fallthru
      _
    // Predicated region
    $region6: #{_padded_linear.1} parent=1 // pred_check
      _
    $region7: #{_padded_linear.1} parent=1 // pred_check_branch
      %23 = sbr.rel (0) target = $region9
    $region8: #{_padded_linear.1} parent=1 // pred_region
      %25 = vsyncadd [#allocation7], 0
      %s26 = sshll.u32 %s1, 4
      %s27 = int_to_ptr.hbm [resolvable:$true] %s26
      %s28 = sshll.u32 [#allocation6], 4
      %s29 = int_to_ptr.vmem [resolvable:$true] %s28
      %34 = dma.hbm_to_vmem [thread:$0]  %s27, 16384, %s29, [#allocation7], 128, 128, 8
    $region9: #{_padded_linear.1} parent=1 // pred_fallthru
      _
    // Predicated region
    $region10: #{_padded_linear.1} parent=1 // pred_check
      _
    $region11: #{_padded_linear.1} parent=1 // pred_check_branch
      %36 = sbr.rel (0) target = $region13
    $region12: #{_padded_linear.1} parent=1 // pred_region
      _
    $region13: #{_padded_linear.1} parent=1 // pred_fallthru
      _
    // Predicated region
    $region14: #{_padded_linear.1} parent=1 // pred_check
      _
    $region15: #{_padded_linear.1} parent=1 // pred_check_branch
      %38 = sbr.rel (0) target = $region17
    $region16: #{_padded_linear.1} parent=1 // pred_region
      %40 = dma.done [#allocation4], 1024
    $region17: #{_padded_linear.1} parent=1 // pred_fallthru
      _
    // Predicated region
    $region18: #{_padded_linear.1} parent=1 // pred_check
      _
    $region19: #{_padded_linear.1} parent=1 // pred_check_branch
      %42 = sbr.rel (0) target = $region21
    $region20: #{_padded_linear.1} parent=1 // pred_region
      %44 = dma.done [#allocation7], 16384
    $region21: #{_padded_linear.1} parent=1 // pred_fallthru
      _
    %p45 = scmp.eq.s32.totalorder 0, 0
    // Predicated region
    $region22: #{_padded_linear.1} parent=1 // pred_check
      %p46 = pneg %p45
    $region23: #{_padded_linear.1} parent=1 // pred_check_branch
      %48 = sbr.rel (%p46) target = $region25
    $region24: #{_padded_linear.1} parent=1 // pred_region
      %49 = vst [vmem:[#allocation2] sm:$0xff] 0.0
    $region25: #{_padded_linear.1} parent=1 // pred_fallthru
      _
    %v50 = vld [vmem:[#allocation2] sm:$0xff]
    %v51 = vld [vmem:[#allocation3] sm:$0xff]
    %v52 = vld [vmem:[#allocation3 + $0x8] sm:$0xff]
    %v53 = vld [vmem:[#allocation3 + $0x10] sm:$0xff]
    %v54 = vld [vmem:[#allocation3 + $0x18] sm:$0xff]
    %v55 = vld [vmem:[#allocation3 + $0x20] sm:$0xff]
    %v56 = vld [vmem:[#allocation3 + $0x28] sm:$0xff]
    %v57 = vld [vmem:[#allocation3 + $0x30] sm:$0xff]
    %v58 = vld [vmem:[#allocation3 + $0x38] sm:$0xff]
    %v59 = vld [vmem:[#allocation6] sm:$0xff]
    %v60 = vld [vmem:[#allocation6 + $0x8] sm:$0xff]
    %v61 = vld [vmem:[#allocation6 + $0x10] sm:$0xff]
    %v62 = vld [vmem:[#allocation6 + $0x18] sm:$0xff]
    %v63 = vld [vmem:[#allocation6 + $0x20] sm:$0xff]
    %v64 = vld [vmem:[#allocation6 + $0x28] sm:$0xff]
    %v65 = vld [vmem:[#allocation6 + $0x30] sm:$0xff]
    %v66 = vld [vmem:[#allocation6 + $0x38] sm:$0xff]
    %v67 = vld [vmem:[#allocation6 + $0x40] sm:$0xff]
    %v68 = vld [vmem:[#allocation6 + $0x48] sm:$0xff]
    %v69 = vld [vmem:[#allocation6 + $0x50] sm:$0xff]
    %v70 = vld [vmem:[#allocation6 + $0x58] sm:$0xff]
    %v71 = vld [vmem:[#allocation6 + $0x60] sm:$0xff]
    %v72 = vld [vmem:[#allocation6 + $0x68] sm:$0xff]
    %v73 = vld [vmem:[#allocation6 + $0x70] sm:$0xff]
    %v74 = vld [vmem:[#allocation6 + $0x78] sm:$0xff]
    %v75 = vld [vmem:[#allocation6 + $0x80] sm:$0xff]
    %v76 = vld [vmem:[#allocation6 + $0x88] sm:$0xff]
    %v77 = vld [vmem:[#allocation6 + $0x90] sm:$0xff]
    %v78 = vld [vmem:[#allocation6 + $0x98] sm:$0xff]
    %v79 = vld [vmem:[#allocation6 + $0xa0] sm:$0xff]
    %v80 = vld [vmem:[#allocation6 + $0xa8] sm:$0xff]
    %v81 = vld [vmem:[#allocation6 + $0xb0] sm:$0xff]
    %v82 = vld [vmem:[#allocation6 + $0xb8] sm:$0xff]
    %v83 = vld [vmem:[#allocation6 + $0xc0] sm:$0xff]
    %v84 = vld [vmem:[#allocation6 + $0xc8] sm:$0xff]
    %v85 = vld [vmem:[#allocation6 + $0xd0] sm:$0xff]
    %v86 = vld [vmem:[#allocation6 + $0xd8] sm:$0xff]
    %v87 = vld [vmem:[#allocation6 + $0xe0] sm:$0xff]
    %v88 = vld [vmem:[#allocation6 + $0xe8] sm:$0xff]
    %v89 = vld [vmem:[#allocation6 + $0xf0] sm:$0xff]
    %v90 = vld [vmem:[#allocation6 + $0xf8] sm:$0xff]
    %v91 = vld [vmem:[#allocation6 + $0x100] sm:$0xff]
    %v92 = vld [vmem:[#allocation6 + $0x108] sm:$0xff]
    %v93 = vld [vmem:[#allocation6 + $0x110] sm:$0xff]
    %v94 = vld [vmem:[#allocation6 + $0x118] sm:$0xff]
    %v95 = vld [vmem:[#allocation6 + $0x120] sm:$0xff]
    %v96 = vld [vmem:[#allocation6 + $0x128] sm:$0xff]
    %v97 = vld [vmem:[#allocation6 + $0x130] sm:$0xff]
    %v98 = vld [vmem:[#allocation6 + $0x138] sm:$0xff]
    %v99 = vld [vmem:[#allocation6 + $0x140] sm:$0xff]
    %v100 = vld [vmem:[#allocation6 + $0x148] sm:$0xff]
    %v101 = vld [vmem:[#allocation6 + $0x150] sm:$0xff]
    %v102 = vld [vmem:[#allocation6 + $0x158] sm:$0xff]
    %v103 = vld [vmem:[#allocation6 + $0x160] sm:$0xff]
    %v104 = vld [vmem:[#allocation6 + $0x168] sm:$0xff]
    %v105 = vld [vmem:[#allocation6 + $0x170] sm:$0xff]
    %v106 = vld [vmem:[#allocation6 + $0x178] sm:$0xff]
    %v107 = vld [vmem:[#allocation6 + $0x180] sm:$0xff]
    %v108 = vld [vmem:[#allocation6 + $0x188] sm:$0xff]
    %v109 = vld [vmem:[#allocation6 + $0x190] sm:$0xff]
    %v110 = vld [vmem:[#allocation6 + $0x198] sm:$0xff]
    %v111 = vld [vmem:[#allocation6 + $0x1a0] sm:$0xff]
    %v112 = vld [vmem:[#allocation6 + $0x1a8] sm:$0xff]
    %v113 = vld [vmem:[#allocation6 + $0x1b0] sm:$0xff]
    %v114 = vld [vmem:[#allocation6 + $0x1b8] sm:$0xff]
    %v115 = vld [vmem:[#allocation6 + $0x1c0] sm:$0xff]
    %v116 = vld [vmem:[#allocation6 + $0x1c8] sm:$0xff]
    %v117 = vld [vmem:[#allocation6 + $0x1d0] sm:$0xff]
    %v118 = vld [vmem:[#allocation6 + $0x1d8] sm:$0xff]
    %v119 = vld [vmem:[#allocation6 + $0x1e0] sm:$0xff]
    %v120 = vld [vmem:[#allocation6 + $0x1e8] sm:$0xff]
    %v121 = vld [vmem:[#allocation6 + $0x1f0] sm:$0xff]
    %v122 = vld [vmem:[#allocation6 + $0x1f8] sm:$0xff]
    %v123 = vld [vmem:[#allocation6 + $0x200] sm:$0xff]
    %v124 = vld [vmem:[#allocation6 + $0x208] sm:$0xff]
    %v125 = vld [vmem:[#allocation6 + $0x210] sm:$0xff]
    %v126 = vld [vmem:[#allocation6 + $0x218] sm:$0xff]
    %v127 = vld [vmem:[#allocation6 + $0x220] sm:$0xff]
    %v128 = vld [vmem:[#allocation6 + $0x228] sm:$0xff]
    %v129 = vld [vmem:[#allocation6 + $0x230] sm:$0xff]
    %v130 = vld [vmem:[#allocation6 + $0x238] sm:$0xff]
    %v131 = vld [vmem:[#allocation6 + $0x240] sm:$0xff]
    %v132 = vld [vmem:[#allocation6 + $0x248] sm:$0xff]
    %v133 = vld [vmem:[#allocation6 + $0x250] sm:$0xff]
    %v134 = vld [vmem:[#allocation6 + $0x258] sm:$0xff]
    %v135 = vld [vmem:[#allocation6 + $0x260] sm:$0xff]
    %v136 = vld [vmem:[#allocation6 + $0x268] sm:$0xff]
    %v137 = vld [vmem:[#allocation6 + $0x270] sm:$0xff]
    %v138 = vld [vmem:[#allocation6 + $0x278] sm:$0xff]
    %v139 = vld [vmem:[#allocation6 + $0x280] sm:$0xff]
    %v140 = vld [vmem:[#allocation6 + $0x288] sm:$0xff]
    %v141 = vld [vmem:[#allocation6 + $0x290] sm:$0xff]
    %v142 = vld [vmem:[#allocation6 + $0x298] sm:$0xff]
    %v143 = vld [vmem:[#allocation6 + $0x2a0] sm:$0xff]
    %v144 = vld [vmem:[#allocation6 + $0x2a8] sm:$0xff]
    %v145 = vld [vmem:[#allocation6 + $0x2b0] sm:$0xff]
    %v146 = vld [vmem:[#allocation6 + $0x2b8] sm:$0xff]
    %v147 = vld [vmem:[#allocation6 + $0x2c0] sm:$0xff]
    %v148 = vld [vmem:[#allocation6 + $0x2c8] sm:$0xff]
    %v149 = vld [vmem:[#allocation6 + $0x2d0] sm:$0xff]
    %v150 = vld [vmem:[#allocation6 + $0x2d8] sm:$0xff]
    %v151 = vld [vmem:[#allocation6 + $0x2e0] sm:$0xff]
    %v152 = vld [vmem:[#allocation6 + $0x2e8] sm:$0xff]
    %v153 = vld [vmem:[#allocation6 + $0x2f0] sm:$0xff]
    %v154 = vld [vmem:[#allocation6 + $0x2f8] sm:$0xff]
    %v155 = vld [vmem:[#allocation6 + $0x300] sm:$0xff]
    %v156 = vld [vmem:[#allocation6 + $0x308] sm:$0xff]
    %v157 = vld [vmem:[#allocation6 + $0x310] sm:$0xff]
    %v158 = vld [vmem:[#allocation6 + $0x318] sm:$0xff]
    %v159 = vld [vmem:[#allocation6 + $0x320] sm:$0xff]
    %v160 = vld [vmem:[#allocation6 + $0x328] sm:$0xff]
    %v161 = vld [vmem:[#allocation6 + $0x330] sm:$0xff]
    %v162 = vld [vmem:[#allocation6 + $0x338] sm:$0xff]
    %v163 = vld [vmem:[#allocation6 + $0x340] sm:$0xff]
    %v164 = vld [vmem:[#allocation6 + $0x348] sm:$0xff]
    %v165 = vld [vmem:[#allocation6 + $0x350] sm:$0xff]
    %v166 = vld [vmem:[#allocation6 + $0x358] sm:$0xff]
    %v167 = vld [vmem:[#allocation6 + $0x360] sm:$0xff]
    %v168 = vld [vmem:[#allocation6 + $0x368] sm:$0xff]
    %v169 = vld [vmem:[#allocation6 + $0x370] sm:$0xff]
    %v170 = vld [vmem:[#allocation6 + $0x378] sm:$0xff]
    %v171 = vld [vmem:[#allocation6 + $0x380] sm:$0xff]
    %v172 = vld [vmem:[#allocation6 + $0x388] sm:$0xff]
    %v173 = vld [vmem:[#allocation6 + $0x390] sm:$0xff]
    %v174 = vld [vmem:[#allocation6 + $0x398] sm:$0xff]
    %v175 = vld [vmem:[#allocation6 + $0x3a0] sm:$0xff]
    %v176 = vld [vmem:[#allocation6 + $0x3a8] sm:$0xff]
    %v177 = vld [vmem:[#allocation6 + $0x3b0] sm:$0xff]
    %v178 = vld [vmem:[#allocation6 + $0x3b8] sm:$0xff]
    %v179 = vld [vmem:[#allocation6 + $0x3c0] sm:$0xff]
    %v180 = vld [vmem:[#allocation6 + $0x3c8] sm:$0xff]
    %v181 = vld [vmem:[#allocation6 + $0x3d0] sm:$0xff]
    %v182 = vld [vmem:[#allocation6 + $0x3d8] sm:$0xff]
    %v183 = vld [vmem:[#allocation6 + $0x3e0] sm:$0xff]
    %v184 = vld [vmem:[#allocation6 + $0x3e8] sm:$0xff]
    %v185 = vld [vmem:[#allocation6 + $0x3f0] sm:$0xff]
    %v186 = vld [vmem:[#allocation6 + $0x3f8] sm:$0xff]
    %187 = vmatpush.msra.mxu0 %v74
    %188 = vmatpush.msra.mxu0 %v73
    %189 = vmatpush.msra.mxu0 %v72
    %190 = vmatpush.msra.mxu0 %v71
    %191 = vmatpush.msra.mxu0 %v70
    %192 = vmatpush.msra.mxu0 %v69
    %193 = vmatpush.msra.mxu0 %v68
    %194 = vmatpush.msra.mxu0 %v67
    %195 = vmatpush.msra.mxu0 %v66
    %196 = vmatpush.msra.mxu0 %v65
    %197 = vmatpush.msra.mxu0 %v64
    %198 = vmatpush.msra.mxu0 %v63
    %199 = vmatpush.msra.mxu0 %v62
    %200 = vmatpush.msra.mxu0 %v61
    %201 = vmatpush.msra.mxu0 %v60
    %202 = vmatpush.msra.mxu0 %v59
    %203 = vmatmul.f32.gmra.mxu0 %v51
    %v204 = vpop.f32.mrf.mxu0
    %v205 = vadd.f32 0.0, %v204
    %206 = vdwg.mxu0
    %207 = vmatpush.msra.mxu0 %v90
    %208 = vmatpush.msra.mxu0 %v89
    %209 = vmatpush.msra.mxu0 %v88
    %210 = vmatpush.msra.mxu0 %v87
    %211 = vmatpush.msra.mxu0 %v86
    %212 = vmatpush.msra.mxu0 %v85
    %213 = vmatpush.msra.mxu0 %v84
    %214 = vmatpush.msra.mxu0 %v83
    %215 = vmatpush.msra.mxu0 %v82
    %216 = vmatpush.msra.mxu0 %v81
    %217 = vmatpush.msra.mxu0 %v80
    %218 = vmatpush.msra.mxu0 %v79
    %219 = vmatpush.msra.mxu0 %v78
    %220 = vmatpush.msra.mxu0 %v77
    %221 = vmatpush.msra.mxu0 %v76
    %222 = vmatpush.msra.mxu0 %v75
    %223 = vmatmul.f32.gmra.mxu0 %v52
    %v224 = vpop.f32.mrf.mxu0
    %v225 = vadd.f32 %v205, %v224
    %226 = vdwg.mxu0
    %227 = vmatpush.msra.mxu0 %v106
    %228 = vmatpush.msra.mxu0 %v105
    %229 = vmatpush.msra.mxu0 %v104
    %230 = vmatpush.msra.mxu0 %v103
    %231 = vmatpush.msra.mxu0 %v102
    %232 = vmatpush.msra.mxu0 %v101
    %233 = vmatpush.msra.mxu0 %v100
    %234 = vmatpush.msra.mxu0 %v99
    %235 = vmatpush.msra.mxu0 %v98
    %236 = vmatpush.msra.mxu0 %v97
    %237 = vmatpush.msra.mxu0 %v96
    %238 = vmatpush.msra.mxu0 %v95
    %239 = vmatpush.msra.mxu0 %v94
    %240 = vmatpush.msra.mxu0 %v93
    %241 = vmatpush.msra.mxu0 %v92
    %242 = vmatpush.msra.mxu0 %v91
    %243 = vmatmul.f32.gmra.mxu0 %v53
    %v244 = vpop.f32.mrf.mxu0
    %v245 = vadd.f32 %v225, %v244
    %246 = vdwg.mxu0
    %247 = vmatpush.msra.mxu0 %v122
    %248 = vmatpush.msra.mxu0 %v121
    %249 = vmatpush.msra.mxu0 %v120
    %250 = vmatpush.msra.mxu0 %v119
    %251 = vmatpush.msra.mxu0 %v118
    %252 = vmatpush.msra.mxu0 %v117
    %253 = vmatpush.msra.mxu0 %v116
    %254 = vmatpush.msra.mxu0 %v115
    %255 = vmatpush.msra.mxu0 %v114
    %256 = vmatpush.msra.mxu0 %v113
    %257 = vmatpush.msra.mxu0 %v112
    %258 = vmatpush.msra.mxu0 %v111
    %259 = vmatpush.msra.mxu0 %v110
    %260 = vmatpush.msra.mxu0 %v109
    %261 = vmatpush.msra.mxu0 %v108
    %262 = vmatpush.msra.mxu0 %v107
    %263 = vmatmul.f32.gmra.mxu0 %v54
    %v264 = vpop.f32.mrf.mxu0
    %v265 = vadd.f32 %v245, %v264
    %266 = vdwg.mxu0
    %267 = vmatpush.msra.mxu0 %v138
    %268 = vmatpush.msra.mxu0 %v137
    %269 = vmatpush.msra.mxu0 %v136
    %270 = vmatpush.msra.mxu0 %v135
    %271 = vmatpush.msra.mxu0 %v134
    %272 = vmatpush.msra.mxu0 %v133
    %273 = vmatpush.msra.mxu0 %v132
    %274 = vmatpush.msra.mxu0 %v131
    %275 = vmatpush.msra.mxu0 %v130
    %276 = vmatpush.msra.mxu0 %v129
    %277 = vmatpush.msra.mxu0 %v128
    %278 = vmatpush.msra.mxu0 %v127
    %279 = vmatpush.msra.mxu0 %v126
    %280 = vmatpush.msra.mxu0 %v125
    %281 = vmatpush.msra.mxu0 %v124
    %282 = vmatpush.msra.mxu0 %v123
    %283 = vmatmul.f32.gmra.mxu0 %v55
    %v284 = vpop.f32.mrf.mxu0
    %v285 = vadd.f32 %v265, %v284
    %286 = vdwg.mxu0
    %287 = vmatpush.msra.mxu0 %v154
    %288 = vmatpush.msra.mxu0 %v153
    %289 = vmatpush.msra.mxu0 %v152
    %290 = vmatpush.msra.mxu0 %v151
    %291 = vmatpush.msra.mxu0 %v150
    %292 = vmatpush.msra.mxu0 %v149
    %293 = vmatpush.msra.mxu0 %v148
    %294 = vmatpush.msra.mxu0 %v147
    %295 = vmatpush.msra.mxu0 %v146
    %296 = vmatpush.msra.mxu0 %v145
    %297 = vmatpush.msra.mxu0 %v144
    %298 = vmatpush.msra.mxu0 %v143
    %299 = vmatpush.msra.mxu0 %v142
    %300 = vmatpush.msra.mxu0 %v141
    %301 = vmatpush.msra.mxu0 %v140
    %302 = vmatpush.msra.mxu0 %v139
    %303 = vmatmul.f32.gmra.mxu0 %v56
    %v304 = vpop.f32.mrf.mxu0
    %v305 = vadd.f32 %v285, %v304
    %306 = vdwg.mxu0
    %307 = vmatpush.msra.mxu0 %v170
    %308 = vmatpush.msra.mxu0 %v169
    %309 = vmatpush.msra.mxu0 %v168
    %310 = vmatpush.msra.mxu0 %v167
    %311 = vmatpush.msra.mxu0 %v166
    %312 = vmatpush.msra.mxu0 %v165
    %313 = vmatpush.msra.mxu0 %v164
    %314 = vmatpush.msra.mxu0 %v163
    %315 = vmatpush.msra.mxu0 %v162
    %316 = vmatpush.msra.mxu0 %v161
    %317 = vmatpush.msra.mxu0 %v160
    %318 = vmatpush.msra.mxu0 %v159
    %319 = vmatpush.msra.mxu0 %v158
    %320 = vmatpush.msra.mxu0 %v157
    %321 = vmatpush.msra.mxu0 %v156
    %322 = vmatpush.msra.mxu0 %v155
    %323 = vmatmul.f32.gmra.mxu0 %v57
    %v324 = vpop.f32.mrf.mxu0
    %v325 = vadd.f32 %v305, %v324
    %326 = vdwg.mxu0
    %327 = vmatpush.msra.mxu0 %v186
    %328 = vmatpush.msra.mxu0 %v185
    %329 = vmatpush.msra.mxu0 %v184
    %330 = vmatpush.msra.mxu0 %v183
    %331 = vmatpush.msra.mxu0 %v182
    %332 = vmatpush.msra.mxu0 %v181
    %333 = vmatpush.msra.mxu0 %v180
    %334 = vmatpush.msra.mxu0 %v179
    %335 = vmatpush.msra.mxu0 %v178
    %336 = vmatpush.msra.mxu0 %v177
    %337 = vmatpush.msra.mxu0 %v176
    %338 = vmatpush.msra.mxu0 %v175
    %339 = vmatpush.msra.mxu0 %v174
    %340 = vmatpush.msra.mxu0 %v173
    %341 = vmatpush.msra.mxu0 %v172
    %342 = vmatpush.msra.mxu0 %v171
    %343 = vmatmul.f32.gmra.mxu0 %v58
    %v344 = vpop.f32.mrf.mxu0
    %v345 = vadd.f32 %v325, %v344
    %346 = vdwg.mxu0
    %v347 = vadd.f32 %v50, %v345
    %348 = vst [vmem:[#allocation2] sm:$0xff] %v347
    // Predicated region
    $region26: #{_padded_linear.1} parent=1 // pred_check
      %p349 = pneg %p45
    $region27: #{_padded_linear.1} parent=1 // pred_check_branch
      %351 = sbr.rel (%p349) target = $region29
    $region28: #{_padded_linear.1} parent=1 // pred_region
      %v352 = vld [vmem:[#allocation2] sm:$0xff]
      %v353 = vld [vmem:[%s2] sm:$0x1]
      %v355 = vperm.slane %v353, 0
      %v357 = vadd.f32 %v352, %v355
      %358 = vst [vmem:[#allocation8] sm:$0xff] %v357
    $region29: #{_padded_linear.1} parent=1 // pred_fallthru
      _
    // Predicated region
    $region30: #{_padded_linear.1} parent=1 // pred_check
      _
    $region31: #{_padded_linear.1} parent=1 // pred_check_branch
      %360 = sbr.rel (0) target = $region33
    $region32: #{_padded_linear.1} parent=1 // pred_region
      %362 = vsyncadd [#allocation5], 0
      %s364 = sshll.u32 [#allocation8], 4
      %s365 = int_to_ptr.vmem [resolvable:$true] %s364
      %s366 = sshll.u32 %s3, 4
      %s367 = int_to_ptr.hbm [resolvable:$true] %s366
      %369 = dma.vmem_to_hbm [thread:$0]  %s365, 128, %s367, [#allocation5]
    $region33: #{_padded_linear.1} parent=1 // pred_fallthru
      _
    // Predicated region
    $region34: #{_padded_linear.1} parent=1 // pred_check
      _
    $region35: #{_padded_linear.1} parent=1 // pred_check_branch
      %371 = sbr.rel (0) target = $region37
    $region36: #{_padded_linear.1} parent=1 // pred_region
      %373 = dma.done [#allocation5], 128
    $region37: #{_padded_linear.1} parent=1 // pred_fallthru
      _
    %374 = vsyncpa [#allocation4], 1
    %375 = vsyncpa [#allocation7], 1
    %376 = vsyncpa [#allocation5], 1

</llo_original>
